<compile_context>
chip_gen: v5e
topology: v5e:2x2
jax: 0.10.0
libtpu: 0.0.40
codegen_flags: <defaults>
</compile_context>

<pallas_src>
import functools

import jax
import jax.numpy as jnp
import numpy as np
from jax.experimental import pallas as pl
from jax.experimental.pallas import tpu as pltpu


def _round_up(x, m):
    return (x + m - 1) // m * m


def _conv_block_kernel(x_ref, w1_ref, b1_ref, w2_ref, b2_ref, mask_ref,
                       o_ref, mid_ref, *, H, W):
    """One grid step = one batch element, channel-major layout.

    x_ref   : (1, Cin_p,  H*W)    input image (VMEM)
    w1_ref  : (Cmid_p, 9*Cin_p)   conv1 weights, taps folded into K (VMEM)
    b1_ref  : (Cmid_p, 1)         conv1 bias (VMEM)
    w2_ref  : (Cout_p, 9*Cmid_p)  conv2 weights (VMEM)
    b2_ref  : (Cout_p, 1)         conv2 bias (VMEM)
    mask_ref: (9, H*W)            0/1 validity mask per 3x3 tap (VMEM)
    o_ref   : (1, Cout_p, H*W)    output (VMEM)
    mid_ref : (Cmid_p, H*W) f32   layer-1 activation scratch (VMEM only)
    """
    HW = H * W
    offs = [(dh, dw) for dh in (-1, 0, 1) for dw in (-1, 0, 1)]

    def conv3x3_relu(act, w_mat, bias):
        # Build the transposed im2col patch (9*C, H*W) with lane rolls (XLU)
        # and boundary masks -- no padded HBM copy, no slice+reshape relayouts.
        taps = []
        for i, (dh, dw) in enumerate(offs):
            delta = dh * W + dw                         # flat offset of tap (dh, dw)
            t = act if delta == 0 else pltpu.roll(act, shift=(-delta) % HW, axis=1)
            if (dh, dw) != (0, 0):
                t = t * mask_ref[i:i + 1, :]            # zero taps falling in the halo
            taps.append(t)
        patch = jnp.concatenate(taps, axis=0)           # (9*C, H*W), sublane-aligned
        # TODO(synk): on v6e/v7x cast patch/w_mat to bf16 here (f32 accumulate) for
        # ~4x MXU throughput; kept f32 to preserve 1e-4 parity with the reference.
        acc = jnp.dot(w_mat, patch, preferred_element_type=jnp.float32)
        return jnp.maximum(acc + bias, 0.0)             # fused bias + ReLU

    x = x_ref[0].astype(jnp.float32)                    # (Cin_p, H*W)
    mid_ref[...] = conv3x3_relu(x, w1_ref[...], b1_ref[...])
    y = conv3x3_relu(mid_ref[...], w2_ref[...], b2_ref[...])
    o_ref[0] = y.astype(o_ref.dtype)


def _tap_masks(H, W):
    """(9, H*W) float32 0/1 masks: mask[t, p] == 1 iff tap t of output pixel p
    reads an in-bounds input pixel (i.e. not the implicit zero padding)."""
    rows = np.arange(H)[:, None]
    cols = np.arange(W)[None, :]
    masks = []
    for dh in (-1, 0, 1):
        for dw in (-1, 0, 1):
            m = ((rows + dh >= 0) & (rows + dh < H) &
                 (cols + dw >= 0) & (cols + dw < W))
            masks.append(m.reshape(-1))
    return jnp.asarray(np.stack(masks).astype(np.float32))


def _pack_weights(w_hwio, b, cin, cin_p, cout, cout_p):
    """(3,3,cin,cout) HWIO conv weight -> (cout_p, 9*cin_p) matmul weight with the
    3x3 taps folded into the contraction dim (order: kh, kw, ci)."""
    w = jnp.pad(w_hwio, ((0, 0), (0, 0), (0, cin_p - cin), (0, cout_p - cout)))
    w_mat = jnp.transpose(w, (3, 0, 1, 2)).reshape(cout_p, 9 * cin_p)
    b_col = jnp.pad(b, (0, cout_p - cout)).reshape(cout_p, 1)
    return w_mat, b_col


def _vmem_limit_bytes(cin_p, cmid_p, cout_p, hw):
    """Rough per-grid-step VMEM budget; only raise the scoped limit when needed."""
    need = 4 * (2 * cin_p * hw            # double-buffered input block
                + 2 * cout_p * hw         # double-buffered output block
                + cmid_p * hw             # intermediate activation scratch
                + 2 * 9 * max(cin_p, cmid_p) * hw   # im2col patch temporaries
                + cmid_p * 9 * cin_p + cout_p * 9 * cmid_p + 9 * hw)
    if need <= 24 * 1024 * 1024:
        return None                       # default scoped VMEM limit is plenty
    try:
        cap = pltpu.get_tpu_info().vmem_capacity_bytes
    except Exception:
        cap = 64 * 1024 * 1024            # conservative (v7x physical VMEM)
    return int(min(need * 5 // 4, cap * 3 // 4))


def conv_block_forward(x_nchw, params):
    """ConvBlock forward. Accepts / returns NCHW like the PyTorch module."""
    w1, b1, w2, b2 = params               # w: (3,3,Cin,Cmid)/(3,3,Cmid,Cout), b: (C,)
    N, Cin, H, W = x_nchw.shape
    Cmid, Cout = w1.shape[-1], w2.shape[-1]
    HW = H * W
    Cin_p, Cmid_p, Cout_p = (_round_up(c, 8) for c in (Cin, Cmid, Cout))

    x = x_nchw.reshape(N, Cin, HW)        # free reshape; stays channel-major
    if Cin_p != Cin:                      # no-op for typical (multiple-of-8) channels
        x = jnp.pad(x, ((0, 0), (0, Cin_p - Cin), (0, 0)))

    w1_mat, b1_col = _pack_weights(w1, b1, Cin, Cin_p, Cmid, Cmid_p)
    w2_mat, b2_col = _pack_weights(w2, b2, Cmid, Cmid_p, Cout, Cout_p)
    masks = _tap_masks(H, W)

    kernel = functools.partial(_conv_block_kernel, H=H, W=W)

    # TODO(synk): for large images, tile H into row strips (2-row halo) so the
    # per-step blocks fit v7x's 64 MiB VMEM; at UNet-ish sizes whole-image
    # blocks per batch element are well within budget.
    out = pl.pallas_call(
        kernel,
        out_shape=jax.ShapeDtypeStruct((N, Cout_p, HW), x_nchw.dtype),
        grid_spec=pltpu.PrefetchScalarGridSpec(
            num_scalar_prefetch=0,
            grid=(N,),
            in_specs=[
                pl.BlockSpec((1, Cin_p, HW), lambda n: (n, 0, 0)),
                pl.BlockSpec((Cmid_p, 9 * Cin_p), lambda n: (0, 0)),
                pl.BlockSpec((Cmid_p, 1), lambda n: (0, 0)),
                pl.BlockSpec((Cout_p, 9 * Cmid_p), lambda n: (0, 0)),
                pl.BlockSpec((Cout_p, 1), lambda n: (0, 0)),
                pl.BlockSpec((9, HW), lambda n: (0, 0)),
            ],
            out_specs=pl.BlockSpec((1, Cout_p, HW), lambda n: (n, 0, 0)),
            scratch_shapes=[pltpu.VMEM((Cmid_p, HW), jnp.float32)],
        ),
        compiler_params=pltpu.CompilerParams(
            dimension_semantics=("parallel",),
            vmem_limit_bytes=_vmem_limit_bytes(Cin_p, Cmid_p, Cout_p, HW),
        ),
    )(x, w1_mat, b1_col, w2_mat, b2_col, masks)

    if Cout_p != Cout:
        out = out[:, :Cout, :]
    return out.reshape(N, Cout, H, W)


def init_conv_block_params(key, in_channels, middle_channels, out_channels):
    """Deterministic synthetic parameters (shapes match nn.Conv2d, stored HWIO)."""
    k1, k2, k3, k4 = jax.random.split(key, 4)
    w1 = jax.random.normal(k1, (3, 3, in_channels, middle_channels), jnp.float32) * 0.1
    b1 = jax.random.normal(k2, (middle_channels,), jnp.float32) * 0.1
    w2 = jax.random.normal(k3, (3, 3, middle_channels, out_channels), jnp.float32) * 0.1
    b2 = jax.random.normal(k4, (out_channels,), jnp.float32) * 0.1
    return (w1, b1, w2, b2)


def _reference_forward(x_nchw, params):
    """Pure-JAX reference (lax conv) for correctness checking."""
    w1, b1, w2, b2 = params
    dn = jax.lax.conv_dimension_numbers(x_nchw.shape, (1, 1, 3, 3),
                                        ("NCHW", "OIHW", "NCHW"))

    def conv(x, w_hwio, b):
        w_oihw = jnp.transpose(w_hwio, (3, 2, 0, 1))  # HWIO -> OIHW
        y = jax.lax.conv_general_dilated(x, w_oihw, (1, 1), ((1, 1), (1, 1)),
                                         dimension_numbers=dn)
        return jnp.maximum(y + b[None, :, None, None], 0.0)

    return conv(conv(x_nchw, w1, b1), w2, b2)


if __name__ == "__main__":
    in_channels, middle_channels, out_channels = 4, 8, 8
    N, H, W = 2, 16, 16

    key = jax.random.PRNGKey(0)
    kx, kp = jax.random.split(key)
    x = jax.random.normal(kx, (N, in_channels, H, W), jnp.float32)
    params = init_conv_block_params(kp, in_channels, middle_channels, out_channels)

    fwd = jax.jit(conv_block_forward)
    out = jax.block_until_ready(fwd(x, params))
    ref = jax.block_until_ready(_reference_forward(x, params))

    assert out.shape == (N, out_channels, H, W), out.shape
    max_err = float(jnp.max(jnp.abs(out - ref)))
    assert jnp.allclose(out, ref, atol=1e-4, rtol=1e-4), max_err
    print("KERNEL_OK")
</pallas_src>

<mosaic_0001>
module attributes {stable_mosaic.version = 11 : i64} {
  func.func @_conv_block_kernel(%arg0: i32, %arg1: memref<1x8x256xf32, #tpu.memory_space<vmem>>, %arg2: memref<8x72xf32, #tpu.memory_space<vmem>>, %arg3: memref<8x1xf32, #tpu.memory_space<vmem>>, %arg4: memref<8x72xf32, #tpu.memory_space<vmem>>, %arg5: memref<8x1xf32, #tpu.memory_space<vmem>>, %arg6: memref<9x256xf32, #tpu.memory_space<vmem>>, %arg7: memref<1x8x256xf32, #tpu.memory_space<vmem>>, %arg8: memref<8x256xf32, #tpu.memory_space<vmem>>) attributes {dimension_semantics = [#tpu.dimension_semantics<parallel>], iteration_bounds = array<i64: 2>, scalar_prefetch = 0 : i64, scratch_operands = 1 : i64, tpu.core_type = #tpu.core_type<tc>, window_params = [{transform_indices = @transform_0, window_bounds = array<i64: 1, 8, 256>}, {pipeline_mode = #tpu.pipeline_mode<synchronous>, transform_indices = @transform_1, window_bounds = array<i64: 8, 72>}, {pipeline_mode = #tpu.pipeline_mode<synchronous>, transform_indices = @transform_2, window_bounds = array<i64: 8, 1>}, {pipeline_mode = #tpu.pipeline_mode<synchronous>, transform_indices = @transform_3, window_bounds = array<i64: 8, 72>}, {pipeline_mode = #tpu.pipeline_mode<synchronous>, transform_indices = @transform_4, window_bounds = array<i64: 8, 1>}, {pipeline_mode = #tpu.pipeline_mode<synchronous>, transform_indices = @transform_5, window_bounds = array<i64: 9, 256>}, {transform_indices = @transform_6, window_bounds = array<i64: 1, 8, 256>}]} {
    %c0 = arith.constant 0 : index
    %c0_0 = arith.constant 0 : index
    %c0_1 = arith.constant 0 : index
    %0 = vector.load %arg1[%c0, %c0_0, %c0_1] : memref<1x8x256xf32, #tpu.memory_space<vmem>>, vector<1x8x256xf32>
    %1 = vector.shape_cast %0 : vector<1x8x256xf32> to vector<8x256xf32>
    %c0_2 = arith.constant 0 : index
    %c0_3 = arith.constant 0 : index
    %2 = vector.load %arg2[%c0_2, %c0_3] : memref<8x72xf32, #tpu.memory_space<vmem>>, vector<8x72xf32>
    %c0_4 = arith.constant 0 : index
    %c0_5 = arith.constant 0 : index
    %3 = vector.load %arg3[%c0_4, %c0_5] : memref<8x1xf32, #tpu.memory_space<vmem>>, vector<8x1xf32>
    %c17_i32 = arith.constant 17 : i32
    %4 = tpu.dynamic_rotate %1 by %c17_i32 dim 1 : vector<8x256xf32>, i32 -> vector<8x256xf32>
    %c0_6 = arith.constant 0 : index
    %c0_7 = arith.constant 0 : index
    %5 = vector.load %arg6[%c0_6, %c0_7] : memref<9x256xf32, #tpu.memory_space<vmem>>, vector<1x256xf32>
    %6 = vector.broadcast %5 : vector<1x256xf32> to vector<8x256xf32>
    %7 = arith.mulf %4, %6 : vector<8x256xf32>
    %c16_i32 = arith.constant 16 : i32
    %8 = tpu.dynamic_rotate %1 by %c16_i32 dim 1 : vector<8x256xf32>, i32 -> vector<8x256xf32>
    %c1 = arith.constant 1 : index
    %c0_8 = arith.constant 0 : index
    %9 = vector.load %arg6[%c1, %c0_8] : memref<9x256xf32, #tpu.memory_space<vmem>>, vector<1x256xf32>
    %10 = vector.broadcast %9 : vector<1x256xf32> to vector<8x256xf32>
    %11 = arith.mulf %8, %10 : vector<8x256xf32>
    %c15_i32 = arith.constant 15 : i32
    %12 = tpu.dynamic_rotate %1 by %c15_i32 dim 1 : vector<8x256xf32>, i32 -> vector<8x256xf32>
    %c2 = arith.constant 2 : index
    %c0_9 = arith.constant 0 : index
    %13 = vector.load %arg6[%c2, %c0_9] : memref<9x256xf32, #tpu.memory_space<vmem>>, vector<1x256xf32>
    %14 = vector.broadcast %13 : vector<1x256xf32> to vector<8x256xf32>
    %15 = arith.mulf %12, %14 : vector<8x256xf32>
    %c1_i32 = arith.constant 1 : i32
    %16 = tpu.dynamic_rotate %1 by %c1_i32 dim 1 : vector<8x256xf32>, i32 -> vector<8x256xf32>
    %c3 = arith.constant 3 : index
    %c0_10 = arith.constant 0 : index
    %17 = vector.load %arg6[%c3, %c0_10] : memref<9x256xf32, #tpu.memory_space<vmem>>, vector<1x256xf32>
    %18 = vector.broadcast %17 : vector<1x256xf32> to vector<8x256xf32>
    %19 = arith.mulf %16, %18 : vector<8x256xf32>
    %c255_i32 = arith.constant 255 : i32
    %20 = tpu.dynamic_rotate %1 by %c255_i32 dim 1 : vector<8x256xf32>, i32 -> vector<8x256xf32>
    %c5 = arith.constant 5 : index
    %c0_11 = arith.constant 0 : index
    %21 = vector.load %arg6[%c5, %c0_11] : memref<9x256xf32, #tpu.memory_space<vmem>>, vector<1x256xf32>
    %22 = vector.broadcast %21 : vector<1x256xf32> to vector<8x256xf32>
    %23 = arith.mulf %20, %22 : vector<8x256xf32>
    %c241_i32 = arith.constant 241 : i32
    %24 = tpu.dynamic_rotate %1 by %c241_i32 dim 1 : vector<8x256xf32>, i32 -> vector<8x256xf32>
    %c6 = arith.constant 6 : index
    %c0_12 = arith.constant 0 : index
    %25 = vector.load %arg6[%c6, %c0_12] : memref<9x256xf32, #tpu.memory_space<vmem>>, vector<1x256xf32>
    %26 = vector.broadcast %25 : vector<1x256xf32> to vector<8x256xf32>
    %27 = arith.mulf %24, %26 : vector<8x256xf32>
    %c240_i32 = arith.constant 240 : i32
    %28 = tpu.dynamic_rotate %1 by %c240_i32 dim 1 : vector<8x256xf32>, i32 -> vector<8x256xf32>
    %c7 = arith.constant 7 : index
    %c0_13 = arith.constant 0 : index
    %29 = vector.load %arg6[%c7, %c0_13] : memref<9x256xf32, #tpu.memory_space<vmem>>, vector<1x256xf32>
    %30 = vector.broadcast %29 : vector<1x256xf32> to vector<8x256xf32>
    %31 = arith.mulf %28, %30 : vector<8x256xf32>
    %c239_i32 = arith.constant 239 : i32
    %32 = tpu.dynamic_rotate %1 by %c239_i32 dim 1 : vector<8x256xf32>, i32 -> vector<8x256xf32>
    %c8 = arith.constant 8 : index
    %c0_14 = arith.constant 0 : index
    %33 = vector.load %arg6[%c8, %c0_14] : memref<9x256xf32, #tpu.memory_space<vmem>>, vector<1x256xf32>
    %34 = vector.broadcast %33 : vector<1x256xf32> to vector<8x256xf32>
    %35 = arith.mulf %32, %34 : vector<8x256xf32>
    %36 = tpu.concatenate %7, %11, %15, %19, %1, %23, %27, %31, %35 in 0 : vector<8x256xf32>, vector<8x256xf32>, vector<8x256xf32>, vector<8x256xf32>, vector<8x256xf32>, vector<8x256xf32>, vector<8x256xf32>, vector<8x256xf32>, vector<8x256xf32> -> vector<72x256xf32>
    %cst = arith.constant dense<0.000000e+00> : vector<8x256xf32>
    %37 = tpu.matmul %2, %36, %cst {dimension_numbers = #tpu.dot_dimension_numbers<[1], [0], [0], [1], [0, 0, 1, 1], [], []>} : vector<8x72xf32>, vector<72x256xf32>, vector<8x256xf32> -> vector<8x256xf32>
    %38 = vector.broadcast %3 : vector<8x1xf32> to vector<8x256xf32>
    %39 = arith.addf %37, %38 : vector<8x256xf32>
    %cst_15 = arith.constant 0.000000e+00 : f32
    %40 = vector.broadcast %cst_15 : f32 to vector<8x256xf32>
    %41 = arith.maximumf %39, %40 : vector<8x256xf32>
    %c0_16 = arith.constant 0 : index
    %c0_17 = arith.constant 0 : index
    %42 = vector.load %arg8[%c0_16, %c0_17] : memref<8x256xf32, #tpu.memory_space<vmem>>, vector<8x256xf32>
    tpu.vector_store %arg8[%c0_16, %c0_17], %41 {strides = array<i32>} : memref<8x256xf32, #tpu.memory_space<vmem>>, vector<8x256xf32>,
    %c0_18 = arith.constant 0 : index
    %c0_19 = arith.constant 0 : index
    %43 = vector.load %arg8[%c0_18, %c0_19] : memref<8x256xf32, #tpu.memory_space<vmem>>, vector<8x256xf32>
    %c0_20 = arith.constant 0 : index
    %c0_21 = arith.constant 0 : index
    %44 = vector.load %arg4[%c0_20, %c0_21] : memref<8x72xf32, #tpu.memory_space<vmem>>, vector<8x72xf32>
    %c0_22 = arith.constant 0 : index
    %c0_23 = arith.constant 0 : index
    %45 = vector.load %arg5[%c0_22, %c0_23] : memref<8x1xf32, #tpu.memory_space<vmem>>, vector<8x1xf32>
    %c17_i32_24 = arith.constant 17 : i32
    %46 = tpu.dynamic_rotate %43 by %c17_i32_24 dim 1 : vector<8x256xf32>, i32 -> vector<8x256xf32>
    %c0_25 = arith.constant 0 : index
    %c0_26 = arith.constant 0 : index
    %47 = vector.load %arg6[%c0_25, %c0_26] : memref<9x256xf32, #tpu.memory_space<vmem>>, vector<1x256xf32>
    %48 = vector.broadcast %47 : vector<1x256xf32> to vector<8x256xf32>
    %49 = arith.mulf %46, %48 : vector<8x256xf32>
    %c16_i32_27 = arith.constant 16 : i32
    %50 = tpu.dynamic_rotate %43 by %c16_i32_27 dim 1 : vector<8x256xf32>, i32 -> vector<8x256xf32>
    %c1_28 = arith.constant 1 : index
    %c0_29 = arith.constant 0 : index
    %51 = vector.load %arg6[%c1_28, %c0_29] : memref<9x256xf32, #tpu.memory_space<vmem>>, vector<1x256xf32>
    %52 = vector.broadcast %51 : vector<1x256xf32> to vector<8x256xf32>
    %53 = arith.mulf %50, %52 : vector<8x256xf32>
    %c15_i32_30 = arith.constant 15 : i32
    %54 = tpu.dynamic_rotate %43 by %c15_i32_30 dim 1 : vector<8x256xf32>, i32 -> vector<8x256xf32>
    %c2_31 = arith.constant 2 : index
    %c0_32 = arith.constant 0 : index
    %55 = vector.load %arg6[%c2_31, %c0_32] : memref<9x256xf32, #tpu.memory_space<vmem>>, vector<1x256xf32>
    %56 = vector.broadcast %55 : vector<1x256xf32> to vector<8x256xf32>
    %57 = arith.mulf %54, %56 : vector<8x256xf32>
    %c1_i32_33 = arith.constant 1 : i32
    %58 = tpu.dynamic_rotate %43 by %c1_i32_33 dim 1 : vector<8x256xf32>, i32 -> vector<8x256xf32>
    %c3_34 = arith.constant 3 : index
    %c0_35 = arith.constant 0 : index
    %59 = vector.load %arg6[%c3_34, %c0_35] : memref<9x256xf32, #tpu.memory_space<vmem>>, vector<1x256xf32>
    %60 = vector.broadcast %59 : vector<1x256xf32> to vector<8x256xf32>
    %61 = arith.mulf %58, %60 : vector<8x256xf32>
    %c255_i32_36 = arith.constant 255 : i32
    %62 = tpu.dynamic_rotate %43 by %c255_i32_36 dim 1 : vector<8x256xf32>, i32 -> vector<8x256xf32>
    %c5_37 = arith.constant 5 : index
    %c0_38 = arith.constant 0 : index
    %63 = vector.load %arg6[%c5_37, %c0_38] : memref<9x256xf32, #tpu.memory_space<vmem>>, vector<1x256xf32>
    %64 = vector.broadcast %63 : vector<1x256xf32> to vector<8x256xf32>
    %65 = arith.mulf %62, %64 : vector<8x256xf32>
    %c241_i32_39 = arith.constant 241 : i32
    %66 = tpu.dynamic_rotate %43 by %c241_i32_39 dim 1 : vector<8x256xf32>, i32 -> vector<8x256xf32>
    %c6_40 = arith.constant 6 : index
    %c0_41 = arith.constant 0 : index
    %67 = vector.load %arg6[%c6_40, %c0_41] : memref<9x256xf32, #tpu.memory_space<vmem>>, vector<1x256xf32>
    %68 = vector.broadcast %67 : vector<1x256xf32> to vector<8x256xf32>
    %69 = arith.mulf %66, %68 : vector<8x256xf32>
    %c240_i32_42 = arith.constant 240 : i32
    %70 = tpu.dynamic_rotate %43 by %c240_i32_42 dim 1 : vector<8x256xf32>, i32 -> vector<8x256xf32>
    %c7_43 = arith.constant 7 : index
    %c0_44 = arith.constant 0 : index
    %71 = vector.load %arg6[%c7_43, %c0_44] : memref<9x256xf32, #tpu.memory_space<vmem>>, vector<1x256xf32>
    %72 = vector.broadcast %71 : vector<1x256xf32> to vector<8x256xf32>
    %73 = arith.mulf %70, %72 : vector<8x256xf32>
    %c239_i32_45 = arith.constant 239 : i32
    %74 = tpu.dynamic_rotate %43 by %c239_i32_45 dim 1 : vector<8x256xf32>, i32 -> vector<8x256xf32>
    %c8_46 = arith.constant 8 : index
    %c0_47 = arith.constant 0 : index
    %75 = vector.load %arg6[%c8_46, %c0_47] : memref<9x256xf32, #tpu.memory_space<vmem>>, vector<1x256xf32>
    %76 = vector.broadcast %75 : vector<1x256xf32> to vector<8x256xf32>
    %77 = arith.mulf %74, %76 : vector<8x256xf32>
    %78 = tpu.concatenate %49, %53, %57, %61, %43, %65, %69, %73, %77 in 0 : vector<8x256xf32>, vector<8x256xf32>, vector<8x256xf32>, vector<8x256xf32>, vector<8x256xf32>, vector<8x256xf32>, vector<8x256xf32>, vector<8x256xf32>, vector<8x256xf32> -> vector<72x256xf32>
    %cst_48 = arith.constant dense<0.000000e+00> : vector<8x256xf32>
    %79 = tpu.matmul %44, %78, %cst_48 {dimension_numbers = #tpu.dot_dimension_numbers<[1], [0], [0], [1], [0, 0, 1, 1], [], []>} : vector<8x72xf32>, vector<72x256xf32>, vector<8x256xf32> -> vector<8x256xf32>
    %80 = vector.broadcast %45 : vector<8x1xf32> to vector<8x256xf32>
    %81 = arith.addf %79, %80 : vector<8x256xf32>
    %cst_49 = arith.constant 0.000000e+00 : f32
    %82 = vector.broadcast %cst_49 : f32 to vector<8x256xf32>
    %83 = arith.maximumf %81, %82 : vector<8x256xf32>
    %c0_50 = arith.constant 0 : index
    %c0_51 = arith.constant 0 : index
    %c0_52 = arith.constant 0 : index
    %84 = vector.load %arg7[%c0_50, %c0_51, %c0_52] : memref<1x8x256xf32, #tpu.memory_space<vmem>>, vector<1x8x256xf32>
    %85 = vector.shape_cast %84 : vector<1x8x256xf32> to vector<8x256xf32>
    %86 = vector.shape_cast %83 : vector<8x256xf32> to vector<1x8x256xf32>
    tpu.vector_store %arg7[%c0_50, %c0_51, %c0_52], %86 {strides = array<i32>} : memref<1x8x256xf32, #tpu.memory_space<vmem>>, vector<1x8x256xf32>,
    return
  }
  func.func @transform_0(%arg0: i32) -> (i32, i32, i32) {
    %c0_i32 = arith.constant 0 : i32
    %c0_i32_0 = arith.constant 0 : i32
    %c0_i32_1 = arith.constant 0 : i32
    return %arg0, %c0_i32, %c0_i32_0 : i32, i32, i32
  }
  func.func @transform_1(%arg0: i32) -> (i32, i32) {
    %c0_i32 = arith.constant 0 : i32
    %c0_i32_0 = arith.constant 0 : i32
    %c0_i32_1 = arith.constant 0 : i32
    return %c0_i32, %c0_i32_0 : i32, i32
  }
  func.func @transform_2(%arg0: i32) -> (i32, i32) {
    %c0_i32 = arith.constant 0 : i32
    %c0_i32_0 = arith.constant 0 : i32
    %c0_i32_1 = arith.constant 0 : i32
    return %c0_i32, %c0_i32_0 : i32, i32
  }
  func.func @transform_3(%arg0: i32) -> (i32, i32) {
    %c0_i32 = arith.constant 0 : i32
    %c0_i32_0 = arith.constant 0 : i32
    %c0_i32_1 = arith.constant 0 : i32
    return %c0_i32, %c0_i32_0 : i32, i32
  }
  func.func @transform_4(%arg0: i32) -> (i32, i32) {
    %c0_i32 = arith.constant 0 : i32
    %c0_i32_0 = arith.constant 0 : i32
    %c0_i32_1 = arith.constant 0 : i32
    return %c0_i32, %c0_i32_0 : i32, i32
  }
  func.func @transform_5(%arg0: i32) -> (i32, i32) {
    %c0_i32 = arith.constant 0 : i32
    %c0_i32_0 = arith.constant 0 : i32
    %c0_i32_1 = arith.constant 0 : i32
    return %c0_i32, %c0_i32_0 : i32, i32
  }
  func.func @transform_6(%arg0: i32) -> (i32, i32, i32) {
    %c0_i32 = arith.constant 0 : i32
    %c0_i32_0 = arith.constant 0 : i32
    %c0_i32_1 = arith.constant 0 : i32
    return %arg0, %c0_i32, %c0_i32_0 : i32, i32, i32
  }
}

</mosaic_0001>

<llo_original>
// kernel: conv_block_forward.1
$region0: #{conv_block_forward.1}
  #allocation0 [shape = 'u32[]', space=smem, size = 0x4, offset = 0x4, fixed_abs, tag = 'smem constant byte address 0x4 - core index']
  #allocation1 [shape = 'u32[72,128]{1,0:T(1,128)}', space=vmem, size = 0x9000, scoped, tag = 'internal scratch']
  #allocation2 [shape = 'f32[8,256]{1,0:T(8,128)}', space=vmem, size = 0x2000, scoped, tag = 'scratch operand']
  %s0 = inlined_call_operand.vmem [shape: f32[2,8,256], index: 0, kind: input, shape index: {}]
  %s1 = inlined_call_operand.vmem [shape: f32[8,72], index: 1, kind: input, shape index: {}]
  %s2 = inlined_call_operand.vmem [shape: f32[8,1], index: 2, kind: input, shape index: {}]
  %s3 = inlined_call_operand.vmem [shape: f32[8,72], index: 3, kind: input, shape index: {}]
  %s4 = inlined_call_operand.vmem [shape: f32[8,1], index: 4, kind: input, shape index: {}]
  %s5 = inlined_call_operand.vmem [shape: f32[9,256], index: 5, kind: input, shape index: {}]
  %s6 = inlined_call_operand.vmem [shape: f32[2,8,256], index: 6, kind: output, shape index: {}]
  %s7 = sld [smem:[#allocation0]]
  $region57: #{conv_block_forward.1} parent=0
    _
  %s9 = ssub.s32 1, %s7
  %s10 = scalar_select 0, %s9, %s7
  loop: start=0, step=1, limit=4
  $region2: #{conv_block_forward.1} parent=0 // loop_pre_header
    _
  $region3: #{conv_block_forward.1} parent=0 // loop_header
    %s12 = sphi 0, %s16
    %p13 = scmp.ge.s32.totalorder %s12, 4
    %s22 = sphi 0, %s24
    %s25 = sphi 0, %s22
    %s26 = sphi 0, %s25
    %s42 = sphi 0, %s26
    %s46 = sphi 0, %s46
    %s48 = sphi 0, %s46
    %s49 = sphi 0, %s48
    %s63 = sphi 0, %s49
    %s67 = sphi 0, %s67
    %s69 = sphi 0, %s67
    %s70 = sphi 0, %s69
    %s84 = sphi 0, %s70
    %s88 = sphi 0, %s88
    %s90 = sphi 0, %s88
    %s91 = sphi 0, %s90
    %s105 = sphi 0, %s91
    %s109 = sphi 0, %s109
    %s111 = sphi 0, %s109
    %s112 = sphi 0, %s111
    %s126 = sphi 0, %s112
    %s130 = sphi 0, %s130
    %s132 = sphi 0, %s130
    %s133 = sphi 0, %s132
    %s147 = sphi 0, %s133
    %s153 = sphi 0, %s155
    %s156 = sphi 0, %s153
    %s157 = sphi 0, %s156
    %s173 = sphi 0, %s157
  $region4: #{conv_block_forward.1} parent=0 // loop_header_branch
    %15 = sbr.rel (%p13) target = $region8
  $region5: #{conv_block_forward.1} parent=0 // loop_body
    %s17 = ssub.s32 %s12, 1
    %s18 = ssub.s32 %s12, 2
    %s19 = sadd.s32 %s12, 1
    %s20 = ssub.s32 %s12, %s19
    %p21 = scmp.eq.s32.totalorder %s20, 0
    %s23 = sadd.s32 %s22, 1
    %s24 = scalar_select %p21, %s22, %s23
    %p27 = pneg %p21
    %p28 = scmp.eq.s32.totalorder %s12, 1
    %p29 = por %p27, %p28
    %p30 = scmp.ne.s32.totalorder %s22, %s25
    %p31 = scmp.eq.s32.totalorder %s12, 0
    %p32 = por %p30, %p31
    %p33 = scmp.ne.s32.totalorder %s22, %s25
    %p34 = scmp.eq.s32.totalorder %s17, 1
    %p35 = por %p33, %p34
    %p36 = scmp.ne.s32.totalorder %s25, %s26
    %p37 = scmp.eq.s32.totalorder %s17, 0
    %p38 = por %p36, %p37
    %p39 = scmp.ne.s32.totalorder %s25, %s26
    %p40 = scmp.eq.s32.totalorder %s18, 1
    %p41 = por %p39, %p40
    %p43 = scmp.ne.s32.totalorder %s26, %s42
    %p44 = scmp.eq.s32.totalorder %s18, 0
    %p45 = por %p43, %p44
    %s47 = sadd.s32 %s46, 1
    %p50 = scmp.eq.s32.totalorder %s12, 1
    %p51 = scmp.ne.s32.totalorder %s46, %s48
    %p52 = scmp.eq.s32.totalorder %s12, 0
    %p53 = por %p51, %p52
    %p54 = scmp.ne.s32.totalorder %s46, %s48
    %p55 = scmp.eq.s32.totalorder %s17, 1
    %p56 = por %p54, %p55
    %p57 = scmp.ne.s32.totalorder %s48, %s49
    %p58 = scmp.eq.s32.totalorder %s17, 0
    %p59 = por %p57, %p58
    %p60 = scmp.ne.s32.totalorder %s48, %s49
    %p61 = scmp.eq.s32.totalorder %s18, 1
    %p62 = por %p60, %p61
    %p64 = scmp.ne.s32.totalorder %s49, %s63
    %p65 = scmp.eq.s32.totalorder %s18, 0
    %p66 = por %p64, %p65
    %s68 = sadd.s32 %s67, 1
    %p71 = scmp.eq.s32.totalorder %s12, 1
    %p72 = scmp.ne.s32.totalorder %s67, %s69
    %p73 = scmp.eq.s32.totalorder %s12, 0
    %p74 = por %p72, %p73
    %p75 = scmp.ne.s32.totalorder %s67, %s69
    %p76 = scmp.eq.s32.totalorder %s17, 1
    %p77 = por %p75, %p76
    %p78 = scmp.ne.s32.totalorder %s69, %s70
    %p79 = scmp.eq.s32.totalorder %s17, 0
    %p80 = por %p78, %p79
    %p81 = scmp.ne.s32.totalorder %s69, %s70
    %p82 = scmp.eq.s32.totalorder %s18, 1
    %p83 = por %p81, %p82
    %p85 = scmp.ne.s32.totalorder %s70, %s84
    %p86 = scmp.eq.s32.totalorder %s18, 0
    %p87 = por %p85, %p86
    %s89 = sadd.s32 %s88, 1
    %p92 = scmp.eq.s32.totalorder %s12, 1
    %p93 = scmp.ne.s32.totalorder %s88, %s90
    %p94 = scmp.eq.s32.totalorder %s12, 0
    %p95 = por %p93, %p94
    %p96 = scmp.ne.s32.totalorder %s88, %s90
    %p97 = scmp.eq.s32.totalorder %s17, 1
    %p98 = por %p96, %p97
    %p99 = scmp.ne.s32.totalorder %s90, %s91
    %p100 = scmp.eq.s32.totalorder %s17, 0
    %p101 = por %p99, %p100
    %p102 = scmp.ne.s32.totalorder %s90, %s91
    %p103 = scmp.eq.s32.totalorder %s18, 1
    %p104 = por %p102, %p103
    %p106 = scmp.ne.s32.totalorder %s91, %s105
    %p107 = scmp.eq.s32.totalorder %s18, 0
    %p108 = por %p106, %p107
    %s110 = sadd.s32 %s109, 1
    %p113 = scmp.eq.s32.totalorder %s12, 1
    %p114 = scmp.ne.s32.totalorder %s109, %s111
    %p115 = scmp.eq.s32.totalorder %s12, 0
    %p116 = por %p114, %p115
    %p117 = scmp.ne.s32.totalorder %s109, %s111
    %p118 = scmp.eq.s32.totalorder %s17, 1
    %p119 = por %p117, %p118
    %p120 = scmp.ne.s32.totalorder %s111, %s112
    %p121 = scmp.eq.s32.totalorder %s17, 0
    %p122 = por %p120, %p121
    %p123 = scmp.ne.s32.totalorder %s111, %s112
    %p124 = scmp.eq.s32.totalorder %s18, 1
    %p125 = por %p123, %p124
    %p127 = scmp.ne.s32.totalorder %s112, %s126
    %p128 = scmp.eq.s32.totalorder %s18, 0
    %p129 = por %p127, %p128
    %s131 = sadd.s32 %s130, 1
    %p134 = scmp.eq.s32.totalorder %s12, 1
    %p135 = scmp.ne.s32.totalorder %s130, %s132
    %p136 = scmp.eq.s32.totalorder %s12, 0
    %p137 = por %p135, %p136
    %p138 = scmp.ne.s32.totalorder %s130, %s132
    %p139 = scmp.eq.s32.totalorder %s17, 1
    %p140 = por %p138, %p139
    %p141 = scmp.ne.s32.totalorder %s132, %s133
    %p142 = scmp.eq.s32.totalorder %s17, 0
    %p143 = por %p141, %p142
    %p144 = scmp.ne.s32.totalorder %s132, %s133
    %p145 = scmp.eq.s32.totalorder %s18, 1
    %p146 = por %p144, %p145
    %p148 = scmp.ne.s32.totalorder %s133, %s147
    %p149 = scmp.eq.s32.totalorder %s18, 0
    %p150 = por %p148, %p149
    %s151 = ssub.s32 %s12, %s19
    %p152 = scmp.eq.s32.totalorder %s151, 0
    %s154 = sadd.s32 %s153, 1
    %s155 = scalar_select %p152, %s153, %s154
    %p158 = pneg %p152
    %p159 = scmp.eq.s32.totalorder %s12, 1
    %p160 = por %p158, %p159
    %p161 = scmp.ne.s32.totalorder %s153, %s156
    %p162 = scmp.eq.s32.totalorder %s12, 0
    %p163 = por %p161, %p162
    %p164 = scmp.ne.s32.totalorder %s153, %s156
    %p165 = scmp.eq.s32.totalorder %s17, 1
    %p166 = por %p164, %p165
    %p167 = scmp.ne.s32.totalorder %s156, %s157
    %p168 = scmp.eq.s32.totalorder %s17, 0
    %p169 = por %p167, %p168
    %p170 = scmp.ne.s32.totalorder %s156, %s157
    %p171 = scmp.eq.s32.totalorder %s18, 1
    %p172 = por %p170, %p171
    %p174 = scmp.ne.s32.totalorder %s157, %s173
    %p175 = scmp.eq.s32.totalorder %s18, 0
    %p176 = por %p174, %p175
    %p177 = scmp.le.s32.totalorder 1, %s12
    %p178 = scmp.lt.s32.totalorder %s12, 3
    %p179 = pnand %p177, %p178
    %p180 = pneg %p179
    // Predicated region
    $region9: #{conv_block_forward.1} parent=5 // pred_check
      _
    $region10: #{conv_block_forward.1} parent=5 // pred_check_branch
      %182 = sbr.rel (%p179) target = $region12
    $region11: #{conv_block_forward.1} parent=5 // pred_region
      %s183 = ssub.s32 %s12, 1
      // Predicated region
      $region13: #{conv_block_forward.1} parent=11 // pred_check
        %p184 = pneg %p59
      $region14: #{conv_block_forward.1} parent=11 // pred_check_branch
        %186 = sbr.rel (%p184) target = $region16
      $region15: #{conv_block_forward.1} parent=11 // pred_region
        _
      $region16: #{conv_block_forward.1} parent=11 // pred_fallthru
        _
      // Predicated region
      $region17: #{conv_block_forward.1} parent=11 // pred_check
        %p187 = pneg %p80
      $region18: #{conv_block_forward.1} parent=11 // pred_check_branch
        %189 = sbr.rel (%p187) target = $region20
      $region19: #{conv_block_forward.1} parent=11 // pred_region
        _
      $region20: #{conv_block_forward.1} parent=11 // pred_fallthru
        _
      // Predicated region
      $region21: #{conv_block_forward.1} parent=11 // pred_check
        %p190 = pneg %p101
      $region22: #{conv_block_forward.1} parent=11 // pred_check_branch
        %192 = sbr.rel (%p190) target = $region24
      $region23: #{conv_block_forward.1} parent=11 // pred_region
        _
      $region24: #{conv_block_forward.1} parent=11 // pred_fallthru
        _
      // Predicated region
      $region25: #{conv_block_forward.1} parent=11 // pred_check
        %p193 = pneg %p122
      $region26: #{conv_block_forward.1} parent=11 // pred_check_branch
        %195 = sbr.rel (%p193) target = $region28
      $region27: #{conv_block_forward.1} parent=11 // pred_region
        _
      $region28: #{conv_block_forward.1} parent=11 // pred_fallthru
        _
      // Predicated region
      $region29: #{conv_block_forward.1} parent=11 // pred_check
        %p196 = pneg %p143
      $region30: #{conv_block_forward.1} parent=11 // pred_check_branch
        %198 = sbr.rel (%p196) target = $region32
      $region31: #{conv_block_forward.1} parent=11 // pred_region
        _
      $region32: #{conv_block_forward.1} parent=11 // pred_fallthru
        _
    $region12: #{conv_block_forward.1} parent=5 // pred_fallthru
      _
    %p199 = scmp.lt.s32.totalorder %s12, 2
    // Predicated region
    $region33: #{conv_block_forward.1} parent=5 // pred_check
      %p200 = pneg %p199
    $region34: #{conv_block_forward.1} parent=5 // pred_check_branch
      %202 = sbr.rel (%p200) target = $region36
    $region35: #{conv_block_forward.1} parent=5 // pred_region
      // Predicated region
      $region37: #{conv_block_forward.1} parent=35 // pred_check
        %p203 = pneg %p32
      $region38: #{conv_block_forward.1} parent=35 // pred_check_branch
        %205 = sbr.rel (%p203) target = $region40
      $region39: #{conv_block_forward.1} parent=35 // pred_region
        %p206 = scmp.lt.s32.totalorder %s12, 1
        %s207 = scalar_select %p206, %s12, 1
        %s208 = smul.addr %s207, 2
        %s209 = smul.addr %s208, 8
        %s210 = scalar_lea.vmem %s0, %s209
      $region40: #{conv_block_forward.1} parent=35 // pred_fallthru
        _
    $region36: #{conv_block_forward.1} parent=5 // pred_fallthru
      _
    %p211 = scmp.le.s32.totalorder 1, %s12
    %p212 = scmp.lt.s32.totalorder %s12, 3
    %p213 = pnand %p211, %p212
    %p214 = pneg %p213
    // Predicated region
    $region41: #{conv_block_forward.1} parent=5 // pred_check
      _
    $region42: #{conv_block_forward.1} parent=5 // pred_check_branch
      %216 = sbr.rel (%p213) target = $region44
    $region43: #{conv_block_forward.1} parent=5 // pred_region
      %s217 = ssub.s32 %s12, 1
      %p218 = scmp.lt.s32.totalorder %s17, 1
      %s219 = scalar_select %p218, %s17, 1
      %s220 = smul.addr %s219, 2
      %s221 = smul.addr %s220, 8
      %s222 = scalar_lea.vmem %s0, %s221
      %p223 = pneg %p38
      %p224 = pneg %p35
      %p225 = pneg %p59
      %p226 = pneg %p56
      %p227 = pneg %p80
      %p228 = pneg %p77
      %p229 = pneg %p101
      %p230 = pneg %p98
      %p231 = pneg %p122
      %p232 = pneg %p119
      %p233 = pneg %p143
      %p234 = pneg %p140
      %p235 = pneg %p169
      %p236 = pneg %p166
      %p237 = scmp.lt.s32.totalorder %s17, 1
      %s238 = scalar_select %p237, %s17, 1
      %s239 = smul.addr %s238, 2
      %s240 = smul.addr %s239, 8
      %s241 = scalar_lea.vmem %s6, %s240
      %p242 = scmp.lt.s32.totalorder %s17, 1
      %s243 = scalar_select %p242, %s17, 1
      %s244 = smul.addr %s243, 2
      %s245 = smul.addr %s244, 8
      %s246 = scalar_lea.vmem %s0, %s245
      %p247 = scmp.lt.s32.totalorder %s17, 1
      %s248 = scalar_select %p247, %s17, 1
      %s249 = smul.addr %s248, 2
      %s250 = smul.addr %s249, 8
      %s251 = scalar_lea.vmem %s6, %s250
      %v252 = vld [vmem:[%s246] sm:$0xff]
      %v253 = vld [vmem:[%s246 + $0x8] sm:$0xff]
      %v254 = vld [vmem:[%s1] sm:$0xff]
      %v255 = vld [vmem:[%s2] sm:$0xff]
      %256 = vrot.lane.b32.xlu0 %v252, 17
      %v257 = vpop.permute.xlu0 %256
      %258 = vrot.lane.b32.xlu0 %v253, 17
      %v259 = vpop.permute.xlu0 %258
      %v260 = vlaneseq
      %v261 = vand.u32 %v260, 127
      %vm262 = vcmp.lt.s32.totalorder %v261, 17
      %v263 = vsel %vm262, %v257, %v259
      %v264 = vsel %vm262, %v259, %v257
      %v265 = vld [vmem:[%s5] ss:$8 sm:$0x3]
      %v267 = vperm.slane %v265, 0
      %v268 = vperm.slane %v265, 1
      %v271 = vmul.f32 %v264, %v267
      %v272 = vmul.f32 %v263, %v268
      %273 = vrot.lane.b32.xlu0 %v252, 16
      %v274 = vpop.permute.xlu0 %273
      %275 = vrot.lane.b32.xlu0 %v253, 16
      %v276 = vpop.permute.xlu0 %275
      %vm277 = vcmp.lt.s32.totalorder %v261, 16
      %v278 = vsel %vm277, %v274, %v276
      %v279 = vsel %vm277, %v276, %v274
      %s280 = scalar_lea.vmem %s5, 1
      %v281 = vld [vmem:[%s280] ss:$8 sm:$0x3]
      %v283 = vperm.slane %v281, 0
      %v284 = vperm.slane %v281, 1
      %v287 = vmul.f32 %v279, %v283
      %v288 = vmul.f32 %v278, %v284
      %289 = vrot.lane.b32.xlu0 %v252, 15
      %v290 = vpop.permute.xlu0 %289
      %291 = vrot.lane.b32.xlu0 %v253, 15
      %v292 = vpop.permute.xlu0 %291
      %vm293 = vcmp.lt.s32.totalorder %v261, 15
      %v294 = vsel %vm293, %v290, %v292
      %v295 = vsel %vm293, %v292, %v290
      %s296 = scalar_lea.vmem %s5, 2
      %v297 = vld [vmem:[%s296] ss:$8 sm:$0x3]
      %v299 = vperm.slane %v297, 0
      %v300 = vperm.slane %v297, 1
      %v303 = vmul.f32 %v295, %v299
      %v304 = vmul.f32 %v294, %v300
      %305 = vrot.lane.b32.xlu0 %v252, 1
      %v306 = vpop.permute.xlu0 %305
      %307 = vrot.lane.b32.xlu0 %v253, 1
      %v308 = vpop.permute.xlu0 %307
      %vm309 = vcmp.lt.s32.totalorder %v261, 1
      %v310 = vsel %vm309, %v306, %v308
      %v311 = vsel %vm309, %v308, %v306
      %s312 = scalar_lea.vmem %s5, 3
      %v313 = vld [vmem:[%s312] ss:$8 sm:$0x3]
      %v315 = vperm.slane %v313, 0
      %v316 = vperm.slane %v313, 1
      %v319 = vmul.f32 %v311, %v315
      %v320 = vmul.f32 %v310, %v316
      %321 = vrot.lane.b32.xlu0 %v252, 127
      %v322 = vpop.permute.xlu0 %321
      %323 = vrot.lane.b32.xlu0 %v253, 127
      %v324 = vpop.permute.xlu0 %323
      %vm325 = vcmp.lt.s32.totalorder %v261, 127
      %v326 = vsel %vm325, %v322, %v324
      %v327 = vsel %vm325, %v324, %v322
      %s328 = scalar_lea.vmem %s5, 5
      %v329 = vld [vmem:[%s328] ss:$8 sm:$0x3]
      %v331 = vperm.slane %v329, 0
      %v332 = vperm.slane %v329, 1
      %v335 = vmul.f32 %v326, %v331
      %v336 = vmul.f32 %v327, %v332
      %337 = vrot.lane.b32.xlu0 %v252, 113
      %v338 = vpop.permute.xlu0 %337
      %339 = vrot.lane.b32.xlu0 %v253, 113
      %v340 = vpop.permute.xlu0 %339
      %vm341 = vcmp.lt.s32.totalorder %v261, 113
      %v342 = vsel %vm341, %v338, %v340
      %v343 = vsel %vm341, %v340, %v338
      %s344 = scalar_lea.vmem %s5, 6
      %v345 = vld [vmem:[%s344] ss:$8 sm:$0x3]
      %v347 = vperm.slane %v345, 0
      %v348 = vperm.slane %v345, 1
      %v351 = vmul.f32 %v342, %v347
      %v352 = vmul.f32 %v343, %v348
      %353 = vrot.lane.b32.xlu0 %v252, 112
      %v354 = vpop.permute.xlu0 %353
      %355 = vrot.lane.b32.xlu0 %v253, 112
      %v356 = vpop.permute.xlu0 %355
      %vm357 = vcmp.lt.s32.totalorder %v261, 112
      %v358 = vsel %vm357, %v354, %v356
      %v359 = vsel %vm357, %v356, %v354
      %s360 = scalar_lea.vmem %s5, 7
      %v361 = vld [vmem:[%s360] ss:$8 sm:$0x3]
      %v363 = vperm.slane %v361, 0
      %v364 = vperm.slane %v361, 1
      %v367 = vmul.f32 %v358, %v363
      %v368 = vmul.f32 %v359, %v364
      %369 = vrot.lane.b32.xlu0 %v252, 111
      %v370 = vpop.permute.xlu0 %369
      %371 = vrot.lane.b32.xlu0 %v253, 111
      %v372 = vpop.permute.xlu0 %371
      %vm373 = vcmp.lt.s32.totalorder %v261, 111
      %v374 = vsel %vm373, %v370, %v372
      %v375 = vsel %vm373, %v372, %v370
      %s376 = scalar_lea.vmem %s5, 16
      %v377 = vld [vmem:[%s376] ss:$8 sm:$0x3]
      %v379 = vperm.slane %v377, 0
      %v380 = vperm.slane %v377, 1
      %v383 = vmul.f32 %v374, %v379
      %v384 = vmul.f32 %v375, %v380
      %386 = vset.pattern.permute.xlu0 0
      %387 = vperm.xlu0 %386, %v255
      %v388 = vpop.permute.xlu0 %387
      %vm390 = vcmask 588800
      %v392 = vsel %vm390, %v254, 0
      %394 = vmatpush.msra.mxu0 0.0
      %395 = vmatpush.msra.mxu0 0.0
      %396 = vmatpush.msra.mxu0 0.0
      %397 = vmatpush.msra.mxu0 0.0
      %398 = vmatpush.msra.mxu0 0.0
      %399 = vmatpush.msra.mxu0 0.0
      %400 = vmatpush.msra.mxu0 0.0
      %401 = vmatpush.msra.mxu0 %v383
      %402 = vmatpush.msra.mxu0 %v367
      %403 = vmatpush.msra.mxu0 %v351
      %404 = vmatpush.msra.mxu0 %v335
      %405 = vmatpush.msra.mxu0 %v252
      %406 = vmatpush.msra.mxu0 %v319
      %407 = vmatpush.msra.mxu0 %v303
      %408 = vmatpush.msra.mxu0 %v287
      %409 = vmatpush.msra.mxu0 %v271
      %410 = vmatmul.f32.gmra.mxu0 %v392
      %v411 = vpop.f32.mrf.mxu0
      %v412 = vadd.f32 %v388, %v411
      %413 = vdwg.mxu0
      %414 = vmatpush.msra.mxu0 0.0
      %415 = vmatpush.msra.mxu0 0.0
      %416 = vmatpush.msra.mxu0 0.0
      %417 = vmatpush.msra.mxu0 0.0
      %418 = vmatpush.msra.mxu0 0.0
      %419 = vmatpush.msra.mxu0 0.0
      %420 = vmatpush.msra.mxu0 0.0
      %421 = vmatpush.msra.mxu0 %v384
      %422 = vmatpush.msra.mxu0 %v368
      %423 = vmatpush.msra.mxu0 %v352
      %424 = vmatpush.msra.mxu0 %v336
      %425 = vmatpush.msra.mxu0 %v253
      %426 = vmatpush.msra.mxu0 %v320
      %427 = vmatpush.msra.mxu0 %v304
      %428 = vmatpush.msra.mxu0 %v288
      %429 = vmatpush.msra.mxu0 %v272
      %430 = vmatmul.f32.gmra.mxu0 %v392
      %v431 = vpop.f32.mrf.mxu0
      %v432 = vadd.f32 %v388, %v431
      %433 = vdwg.mxu0
      %v434 = vmax.f32 %v412, 0.0
      %v435 = vmax.f32 %v432, 0.0
      %436 = vst [vmem:[#allocation2] sm:$0xff] %v434
      %437 = vst [vmem:[#allocation2 + $0x8] sm:$0xff] %v435
      %v438 = vld [vmem:[#allocation2] sm:$0xff]
      %v439 = vld [vmem:[#allocation2 + $0x8] sm:$0xff]
      %v440 = vld [vmem:[%s3] sm:$0xff]
      %v441 = vld [vmem:[%s4] sm:$0xff]
      %442 = vrot.lane.b32.xlu0 %v438, 17
      %v443 = vpop.permute.xlu0 %442
      %444 = vrot.lane.b32.xlu0 %v439, 17
      %v445 = vpop.permute.xlu0 %444
      %v446 = vsel %vm262, %v443, %v445
      %v447 = vsel %vm262, %v445, %v443
      %v448 = vld [vmem:[%s5] ss:$8 sm:$0x3]
      %v450 = vperm.slane %v448, 0
      %v451 = vperm.slane %v448, 1
      %v454 = vmul.f32 %v447, %v450
      %v455 = vmul.f32 %v446, %v451
      %456 = vrot.lane.b32.xlu0 %v438, 16
      %v457 = vpop.permute.xlu0 %456
      %458 = vrot.lane.b32.xlu0 %v439, 16
      %v459 = vpop.permute.xlu0 %458
      %v460 = vsel %vm277, %v457, %v459
      %v461 = vsel %vm277, %v459, %v457
      %v462 = vld [vmem:[%s280] ss:$8 sm:$0x3]
      %v464 = vperm.slane %v462, 0
      %v465 = vperm.slane %v462, 1
      %v468 = vmul.f32 %v461, %v464
      %v469 = vmul.f32 %v460, %v465
      %470 = vrot.lane.b32.xlu0 %v438, 15
      %v471 = vpop.permute.xlu0 %470
      %472 = vrot.lane.b32.xlu0 %v439, 15
      %v473 = vpop.permute.xlu0 %472
      %v474 = vsel %vm293, %v471, %v473
      %v475 = vsel %vm293, %v473, %v471
      %v476 = vld [vmem:[%s296] ss:$8 sm:$0x3]
      %v478 = vperm.slane %v476, 0
      %v479 = vperm.slane %v476, 1
      %v482 = vmul.f32 %v475, %v478
      %v483 = vmul.f32 %v474, %v479
      %484 = vrot.lane.b32.xlu0 %v438, 1
      %v485 = vpop.permute.xlu0 %484
      %486 = vrot.lane.b32.xlu0 %v439, 1
      %v487 = vpop.permute.xlu0 %486
      %v488 = vsel %vm309, %v485, %v487
      %v489 = vsel %vm309, %v487, %v485
      %v490 = vld [vmem:[%s312] ss:$8 sm:$0x3]
      %v492 = vperm.slane %v490, 0
      %v493 = vperm.slane %v490, 1
      %v496 = vmul.f32 %v489, %v492
      %v497 = vmul.f32 %v488, %v493
      %498 = vrot.lane.b32.xlu0 %v438, 127
      %v499 = vpop.permute.xlu0 %498
      %500 = vrot.lane.b32.xlu0 %v439, 127
      %v501 = vpop.permute.xlu0 %500
      %v502 = vsel %vm325, %v499, %v501
      %v503 = vsel %vm325, %v501, %v499
      %v504 = vld [vmem:[%s328] ss:$8 sm:$0x3]
      %v506 = vperm.slane %v504, 0
      %v507 = vperm.slane %v504, 1
      %v510 = vmul.f32 %v502, %v506
      %v511 = vmul.f32 %v503, %v507
      %512 = vrot.lane.b32.xlu0 %v438, 113
      %v513 = vpop.permute.xlu0 %512
      %514 = vrot.lane.b32.xlu0 %v439, 113
      %v515 = vpop.permute.xlu0 %514
      %v516 = vsel %vm341, %v513, %v515
      %v517 = vsel %vm341, %v515, %v513
      %v518 = vld [vmem:[%s344] ss:$8 sm:$0x3]
      %v520 = vperm.slane %v518, 0
      %v521 = vperm.slane %v518, 1
      %v524 = vmul.f32 %v516, %v520
      %v525 = vmul.f32 %v517, %v521
      %526 = vrot.lane.b32.xlu0 %v438, 112
      %v527 = vpop.permute.xlu0 %526
      %528 = vrot.lane.b32.xlu0 %v439, 112
      %v529 = vpop.permute.xlu0 %528
      %v530 = vsel %vm357, %v527, %v529
      %v531 = vsel %vm357, %v529, %v527
      %v532 = vld [vmem:[%s360] ss:$8 sm:$0x3]
      %v534 = vperm.slane %v532, 0
      %v535 = vperm.slane %v532, 1
      %v538 = vmul.f32 %v530, %v534
      %v539 = vmul.f32 %v531, %v535
      %540 = vrot.lane.b32.xlu0 %v438, 111
      %v541 = vpop.permute.xlu0 %540
      %542 = vrot.lane.b32.xlu0 %v439, 111
      %v543 = vpop.permute.xlu0 %542
      %v544 = vsel %vm373, %v541, %v543
      %v545 = vsel %vm373, %v543, %v541
      %v546 = vld [vmem:[%s376] ss:$8 sm:$0x3]
      %v548 = vperm.slane %v546, 0
      %v549 = vperm.slane %v546, 1
      %v552 = vmul.f32 %v544, %v548
      %v553 = vmul.f32 %v545, %v549
      %555 = vset.pattern.permute.xlu0 0
      %556 = vperm.xlu0 %555, %v441
      %v557 = vpop.permute.xlu0 %556
      %v560 = vsel %vm390, %v440, 0
      %562 = vmatpush.msra.mxu0 0.0
      %563 = vmatpush.msra.mxu0 0.0
      %564 = vmatpush.msra.mxu0 0.0
      %565 = vmatpush.msra.mxu0 0.0
      %566 = vmatpush.msra.mxu0 0.0
      %567 = vmatpush.msra.mxu0 0.0
      %568 = vmatpush.msra.mxu0 0.0
      %569 = vmatpush.msra.mxu0 %v552
      %570 = vmatpush.msra.mxu0 %v538
      %571 = vmatpush.msra.mxu0 %v524
      %572 = vmatpush.msra.mxu0 %v510
      %573 = vmatpush.msra.mxu0 %v438
      %574 = vmatpush.msra.mxu0 %v496
      %575 = vmatpush.msra.mxu0 %v482
      %576 = vmatpush.msra.mxu0 %v468
      %577 = vmatpush.msra.mxu0 %v454
      %578 = vmatmul.f32.gmra.mxu0 %v560
      %v579 = vpop.f32.mrf.mxu0
      %v580 = vadd.f32 %v557, %v579
      %581 = vdwg.mxu0
      %582 = vmatpush.msra.mxu0 0.0
      %583 = vmatpush.msra.mxu0 0.0
      %584 = vmatpush.msra.mxu0 0.0
      %585 = vmatpush.msra.mxu0 0.0
      %586 = vmatpush.msra.mxu0 0.0
      %587 = vmatpush.msra.mxu0 0.0
      %588 = vmatpush.msra.mxu0 0.0
      %589 = vmatpush.msra.mxu0 %v553
      %590 = vmatpush.msra.mxu0 %v539
      %591 = vmatpush.msra.mxu0 %v525
      %592 = vmatpush.msra.mxu0 %v511
      %593 = vmatpush.msra.mxu0 %v439
      %594 = vmatpush.msra.mxu0 %v497
      %595 = vmatpush.msra.mxu0 %v483
      %596 = vmatpush.msra.mxu0 %v469
      %597 = vmatpush.msra.mxu0 %v455
      %598 = vmatmul.f32.gmra.mxu0 %v560
      %v599 = vpop.f32.mrf.mxu0
      %v600 = vadd.f32 %v557, %v599
      %601 = vdwg.mxu0
      %v602 = vmax.f32 %v580, 0.0
      %v603 = vmax.f32 %v600, 0.0
      %604 = vst [vmem:[%s251] sm:$0xff] %v602
      %605 = vst [vmem:[%s251 + $0x8] sm:$0xff] %v603
      %p606 = scmp.lt.s32.totalorder %s17, 1
      %s607 = scalar_select %p606, %s17, 1
      %s608 = smul.addr %s607, 2
      %s609 = smul.addr %s608, 8
      %s610 = scalar_lea.vmem %s6, %s609
      // Predicated region
      $region45: #{conv_block_forward.1} parent=43 // pred_check
        %p611 = pneg %p166
      $region46: #{conv_block_forward.1} parent=43 // pred_check_branch
        %613 = sbr.rel (%p611) target = $region48
      $region47: #{conv_block_forward.1} parent=43 // pred_region
        _
      $region48: #{conv_block_forward.1} parent=43 // pred_fallthru
        _
    $region44: #{conv_block_forward.1} parent=5 // pred_fallthru
      _
    %p614 = scmp.le.s32.totalorder 2, %s12
    // Predicated region
    $region49: #{conv_block_forward.1} parent=5 // pred_check
      %p615 = pneg %p614
    $region50: #{conv_block_forward.1} parent=5 // pred_check_branch
      %617 = sbr.rel (%p615) target = $region52
    $region51: #{conv_block_forward.1} parent=5 // pred_region
      %s618 = ssub.s32 %s12, 2
      // Predicated region
      $region53: #{conv_block_forward.1} parent=51 // pred_check
        %p619 = pneg %p172
      $region54: #{conv_block_forward.1} parent=51 // pred_check_branch
        %621 = sbr.rel (%p619) target = $region56
      $region55: #{conv_block_forward.1} parent=51 // pred_region
        %p622 = scmp.lt.s32.totalorder %s18, 1
        %s623 = scalar_select %p622, %s18, 1
        %s624 = smul.addr %s623, 2
        %s625 = smul.addr %s624, 8
        %s626 = scalar_lea.vmem %s6, %s625
      $region56: #{conv_block_forward.1} parent=51 // pred_fallthru
        _
    $region52: #{conv_block_forward.1} parent=5 // pred_fallthru
      _
  $region6: #{conv_block_forward.1} parent=0 // loop_footer
    %s16 = sadd.s32 1, %s12
  $region7: #{conv_block_forward.1} parent=0 // loop_footer_branch
    %11 = sbr.rel target = $region3
  $region8: #{conv_block_forward.1} parent=0 // loop_exit
    _

</llo_original>
